<compile_context>
chip_gen: v6e
topology: v6e:2x2x1
jax: 0.10.0
libtpu: 0.0.40
codegen_flags: <defaults>
</compile_context>

<pallas_src>
import math

import jax
import jax.numpy as jnp
from jax.experimental import pallas as pl
from jax.experimental.pallas import tpu as pltpu

_SQRT_2_OVER_PI = math.sqrt(2.0 / math.pi)
_C2 = _SQRT_2_OVER_PI * 0.044715  # fold 0.044715 into the constant (one fewer mul)

_LANE = 128


def _gelu_kernel(x_ref, o_ref):
    # Compute in f32 regardless of storage dtype (matches the torch reference,
    # and v5e has no bf16 VPU/EUP).
    x = x_ref[...].astype(jnp.float32)
    inner = x * (_SQRT_2_OVER_PI + _C2 * x * x)
    y = 0.5 * x * (1.0 + jnp.tanh(inner))
    o_ref[...] = y.astype(o_ref.dtype)


def _sublane_multiple(dtype) -> int:
    """Minimum legal/efficient row multiple: 8 for 4B, 16 for 2B, 32 for 1B."""
    itemsize = max(1, jnp.dtype(dtype).itemsize)
    return max(8, 8 * (4 // itemsize))


def _target_tile_bytes() -> int:
    """Per-input-tile byte budget, sized to the generation's scoped VMEM."""
    try:
        kind = jax.devices()[0].device_kind.lower()
    except Exception:  # pragma: no cover - defensive
        kind = ""
    if any(g in kind for g in ("v2", "v3", "v4", "v5")):
        # v5e default scoped VMEM is 16 MiB; 2 MiB in + 2 MiB out, double
        # buffered = 8 MiB.  At 0.82 TB/s each step is ~5 us, overhead <10%.
        return 2 * 1024 * 1024
    # v6e / v7x: 4 MiB tiles -> 16 MiB double-buffered, fits the 32 MiB
    # default scoped limit with no flag changes; per-step overhead <10%.
    return 4 * 1024 * 1024


def _as_2d(x: jax.Array) -> jax.Array:
    """Collapse to a 2D slab with no pad and no trailing slice."""
    if x.ndim == 0:
        return x.reshape(1, 1)
    last = x.shape[-1]
    total = x.size
    if last % _LANE == 0:
        # Free reshape: collapse leading dims, keep the native lane-dense
        # last dim untouched (no relayout).
        return x.reshape(-1, last)
    if total % _LANE == 0:
        # Lane-unfriendly last dim (e.g. 32): build a 128-lane-dense slab.
        # Still no pad and no slice-back afterwards.
        return x.reshape(total // _LANE, _LANE)
    # Awkward total: keep the native last dim.  The block's last dim equals
    # the full array dim (always legal); only boundary stores are masked.
    return x.reshape(-1, last)


def _choose_tiles(rows: int, width: int, dtype):
    itemsize = max(1, jnp.dtype(dtype).itemsize)
    sub = _sublane_multiple(dtype)
    target = _target_tile_bytes()

    # Lane tile: full native width when lane-aligned and of moderate size;
    # otherwise chunk it in multiples of 128 (partial boundary block is fine).
    if width % _LANE == 0:
        max_lane = max(_LANE, (target // (sub * itemsize)) // _LANE * _LANE)
        lane_tile = min(width, max_lane)
    else:
        lane_tile = width  # equals the full dim -> always legal

    # Row tile: ~`target` bytes per input tile, multiple of the sublane pack.
    rows_for_target = max(1, target // max(1, lane_tile * itemsize))
    row_tile = max(sub, (rows_for_target // sub) * sub)
    if row_tile >= rows:
        row_tile = rows  # whole axis in one block (full dim -> always legal)
    return row_tile, lane_tile


def gelu(x: jax.Array) -> jax.Array:
    """Elementwise tanh-GELU, matching the PyTorch reference formula."""
    if x.size == 0:
        return x

    orig_shape = x.shape
    x2d = _as_2d(x)
    rows, width = x2d.shape
    row_tile, lane_tile = _choose_tiles(rows, width, x2d.dtype)

    grid = (pl.cdiv(rows, row_tile), pl.cdiv(width, lane_tile))

    out2d = pl.pallas_call(
        _gelu_kernel,
        out_shape=jax.ShapeDtypeStruct((rows, width), x2d.dtype),
        grid_spec=pl.GridSpec(
            grid=grid,
            in_specs=[pl.BlockSpec((row_tile, lane_tile), lambda i, j: (i, j))],
            out_specs=pl.BlockSpec((row_tile, lane_tile), lambda i, j: (i, j)),
        ),
        compiler_params=pltpu.CompilerParams(
            dimension_semantics=("parallel", "parallel"),
        ),
    )(x2d)

    return out2d.reshape(orig_shape)


def _gelu_reference(x):
    c = math.sqrt(2.0 / math.pi)
    xf = x.astype(jnp.float32)
    y = 0.5 * xf * (1.0 + jnp.tanh(c * (xf + 0.044715 * jnp.power(xf, 3))))
    return y.astype(x.dtype)


if __name__ == "__main__":
    key = jax.random.PRNGKey(0)
    k1, k2 = jax.random.split(key)

    # Shape implied by the LLM module's usage: batch=2, seq=8, hidden=32
    # (lane-unfriendly last dim -> exercises the 128-lane slab path).
    x_small = jax.random.normal(k1, (2, 8, 32), dtype=jnp.float32)
    y_small = gelu(x_small)
    jax.block_until_ready(y_small)
    assert y_small.shape == x_small.shape and y_small.dtype == x_small.dtype
    assert jnp.allclose(y_small, _gelu_reference(x_small), atol=1e-6, rtol=1e-6)

    # Lane-aligned last dim (common transformer case) -> exercises the
    # free-reshape, native-lane-width path with no relayout.
    x_aligned = jax.random.normal(k2, (2, 8, 128), dtype=jnp.float32)
    y_aligned = gelu(x_aligned)
    jax.block_until_ready(y_aligned)
    assert y_aligned.shape == x_aligned.shape
    assert jnp.allclose(y_aligned, _gelu_reference(x_aligned), atol=1e-6, rtol=1e-6)

    print("KERNEL_OK")
</pallas_src>

<mosaic_0001>
module attributes {stable_mosaic.version = 11 : i64} {
  func.func @_gelu_kernel(%arg0: i32, %arg1: i32, %arg2: memref<4x128xf32, #tpu.memory_space<vmem>>, %arg3: memref<4x128xf32, #tpu.memory_space<vmem>>) attributes {dimension_semantics = [#tpu.dimension_semantics<parallel>, #tpu.dimension_semantics<parallel>], iteration_bounds = array<i64: 1, 1>, scalar_prefetch = 0 : i64, scratch_operands = 0 : i64, tpu.core_type = #tpu.core_type<tc>, window_params = [{transform_indices = @transform_0, window_bounds = array<i64: 4, 128>}, {transform_indices = @transform_1, window_bounds = array<i64: 4, 128>}]} {
    %c0 = arith.constant 0 : index
    %c0_0 = arith.constant 0 : index
    %0 = vector.load %arg2[%c0, %c0_0] : memref<4x128xf32, #tpu.memory_space<vmem>>, vector<4x128xf32>
    %cst = arith.constant 0.0356774069 : f32
    %1 = vector.broadcast %cst : f32 to vector<4x128xf32>
    %2 = arith.mulf %1, %0 : vector<4x128xf32>
    %3 = arith.mulf %2, %0 : vector<4x128xf32>
    %cst_1 = arith.constant 0.797884583 : f32
    %4 = vector.broadcast %cst_1 : f32 to vector<4x128xf32>
    %5 = arith.addf %4, %3 : vector<4x128xf32>
    %6 = arith.mulf %0, %5 : vector<4x128xf32>
    %cst_2 = arith.constant 5.000000e-01 : f32
    %7 = vector.broadcast %cst_2 : f32 to vector<4x128xf32>
    %8 = arith.mulf %7, %0 : vector<4x128xf32>
    %9 = math.tanh %6 : vector<4x128xf32>
    %cst_3 = arith.constant 1.000000e+00 : f32
    %10 = vector.broadcast %cst_3 : f32 to vector<4x128xf32>
    %11 = arith.addf %10, %9 : vector<4x128xf32>
    %12 = arith.mulf %8, %11 : vector<4x128xf32>
    %c0_4 = arith.constant 0 : index
    %c0_5 = arith.constant 0 : index
    %13 = vector.load %arg3[%c0_4, %c0_5] : memref<4x128xf32, #tpu.memory_space<vmem>>, vector<4x128xf32>
    tpu.vector_store %arg3[%c0_4, %c0_5], %12 {strides = array<i32>} : memref<4x128xf32, #tpu.memory_space<vmem>>, vector<4x128xf32>,
    return
  }
  func.func @transform_0(%arg0: i32, %arg1: i32) -> (i32, i32) {
    %c0_i32 = arith.constant 0 : i32
    return %arg0, %arg1 : i32, i32
  }
  func.func @transform_1(%arg0: i32, %arg1: i32) -> (i32, i32) {
    %c0_i32 = arith.constant 0 : i32
    return %arg0, %arg1 : i32, i32
  }
}

</mosaic_0001>

<llo_original>
// kernel: tpu_custom_call.1
$region0: #{tpu_custom_call.1}
  #allocation0 [shape = 'u32[]', space=smem, size = 0x4, offset = 0x4, fixed_abs, tag = 'smem constant byte address 0x4 - core index']
  #allocation1 [shape = 'u32[144,128]{1,0:T(1,128)}', space=vmem, size = 0x12000, scoped, tag = 'internal scratch']
  %s0 = inlined_call_operand.hbm [shape: f32[4,128], index: 0, kind: input, shape index: {}]
  %s1 = inlined_call_operand.hbm [shape: f32[4,128], index: 1, kind: output, shape index: {}]
  %s2 = sld [smem:[#allocation0]]
  $region18: #{tpu_custom_call.1} parent=0
    _
  %s4 = ssub.s32 1, %s2
  %s5 = scalar_select 0, %s4, %s2
  $region1: #{tpu_custom_call.1} parent=0
    #allocation2 [shape = 'u8[2048]{0}', space=vmem, size = 0x800, scoped, tag = 'input window, operand 0, single buffered']
    #allocation3 [shape = 's32[1]{0}', space=sflag, size = 0x4, scoped, tag = 'scoped memory for tpu_custom_call.1']
    #allocation4 [shape = 's32[1]{0}', space=sflag, size = 0x4, scoped, tag = 'scoped memory for tpu_custom_call.1']
    #allocation5 [shape = 'u8[2048]{0}', space=vmem, size = 0x800, scoped, tag = 'output window, operand 0, single buffered']
    %6 = vsyncpa [#allocation3], 0
    %7 = vsyncpa [#allocation4], 0
    // Predicated region
    $region2: #{tpu_custom_call.1} parent=1 // pred_check
      _
    $region3: #{tpu_custom_call.1} parent=1 // pred_check_branch
      %9 = sbr.rel (0) target = $region5
    $region4: #{tpu_custom_call.1} parent=1 // pred_region
      %s11 = ssub.s32 64, 64
      %12 = vsyncadd [#allocation3], %s11
      %s14 = sshll.u32 [#allocation2], 4
      %s15 = int_to_ptr.vmem [resolvable:$true] %s14
      %17 = dma.hbm_to_vmem [thread:$0]  %s0, 64, %s15, [#allocation3]
    $region5: #{tpu_custom_call.1} parent=1 // pred_fallthru
      _
    // Predicated region
    $region6: #{tpu_custom_call.1} parent=1 // pred_check
      _
    $region7: #{tpu_custom_call.1} parent=1 // pred_check_branch
      %19 = sbr.rel (0) target = $region9
    $region8: #{tpu_custom_call.1} parent=1 // pred_region
      %20 = dma.done [#allocation3], 64
    $region9: #{tpu_custom_call.1} parent=1 // pred_fallthru
      _
    %v21 = vld [vmem:[#allocation2] sm:$0xf]
    %v22 = vmul.f32 %v21, 0.035677407
    %v23 = vmul.f32 %v22, %v21
    %v24 = vadd.f32 %v23, 0.7978846
    %v25 = vmul.f32 %v21, %v24
    %v26 = vmul.f32 %v21, 0.5
    %v27 = vtanh.pop %v25
    %v28 = vadd.f32 %v27, 1.0
    %v29 = vmul.f32 %v26, %v28
    %30 = vst [vmem:[#allocation5] sm:$0xf] %v29
    // Predicated region
    $region10: #{tpu_custom_call.1} parent=1 // pred_check
      _
    $region11: #{tpu_custom_call.1} parent=1 // pred_check_branch
      %32 = sbr.rel (0) target = $region13
    $region12: #{tpu_custom_call.1} parent=1 // pred_region
      %s34 = ssub.s32 64, 64
      %35 = vsyncadd [#allocation4], %s34
      %s37 = sshll.u32 [#allocation5], 4
      %s38 = int_to_ptr.vmem [resolvable:$true] %s37
      %40 = dma.vmem_to_hbm [thread:$0]  %s38, 64, %s1, [#allocation4]
    $region13: #{tpu_custom_call.1} parent=1 // pred_fallthru
      _
    // Predicated region
    $region14: #{tpu_custom_call.1} parent=1 // pred_check
      _
    $region15: #{tpu_custom_call.1} parent=1 // pred_check_branch
      %42 = sbr.rel (0) target = $region17
    $region16: #{tpu_custom_call.1} parent=1 // pred_region
      %43 = dma.done [#allocation4], 64
    $region17: #{tpu_custom_call.1} parent=1 // pred_fallthru
      _
    %44 = vsyncpa [#allocation3], 1
    %45 = vsyncpa [#allocation4], 1

</llo_original>
